<compile_context>
chip_gen: v7x
topology: tpu7x:2x2x1
jax: 0.10.0
libtpu: 0.0.40
codegen_flags: <defaults>
</compile_context>

<pallas_src>
import math
import jax
import jax.numpy as jnp
from jax.experimental import pallas as pl
from jax.experimental.pallas import tpu as pltpu


_SQRT_2_OVER_PI = 0.7978845608028654
_GELU_C = 0.044715


def _gelu_tanh(z):
    # tanh-form GELU (<~1e-3 off the exact erf form); tanh lands on the EUP
    # slot so the VPU only sees the polynomial + multiply-adds.
    inner = _SQRT_2_OVER_PI * (z + _GELU_C * (z * z * z))
    return 0.5 * z * (1.0 + jnp.tanh(inner))


# ----------------------- fused single-pass kernel ---------------------------

def _make_fused_kernel(inv_count, eps):
    def kernel(a_ref, w_ref, p_ref, g_ref, bt_ref, o_ref):
        # Conv as one MXU matmul: bf16 operands, f32 accumulation, lane-dense
        # (M, Wo*Cout) result that never leaves VMEM.
        y = jnp.dot(a_ref[...], w_ref[...], preferred_element_type=jnp.float32)
        # Batch statistics: sublane (row) reduction first, then fold the
        # Wo-replicated lane groups into per-channel sums AND broadcast them
        # back to lane width with one tiny matmul against the same-channel
        # matrix P (no in-kernel reshapes of the lane dim).
        s = jnp.sum(y, axis=0, keepdims=True)                       # (1, L)
        sq = jnp.sum(y * y, axis=0, keepdims=True)                  # (1, L)
        sum_ch = jnp.dot(s, p_ref[...], preferred_element_type=jnp.float32)
        sumsq_ch = jnp.dot(sq, p_ref[...], preferred_element_type=jnp.float32)
        mean = sum_ch * inv_count
        var = jnp.maximum(sumsq_ch * inv_count - mean * mean, 0.0)  # clamp
        # Folded training-mode BN affine: z = a*y + b (per-lane vectors).
        a_bn = g_ref[...] * jax.lax.rsqrt(var + eps)
        b_bn = bt_ref[...] - mean * a_bn
        z = y * a_bn + b_bn
        o_ref[...] = _gelu_tanh(z)
    return kernel


# ------------------------ tiled two-pass kernels ----------------------------

def _conv_stats_kernel(a_ref, w_ref, y_ref, s_ref, sq_ref):
    acc = jnp.dot(a_ref[...], w_ref[...], preferred_element_type=jnp.float32)
    y_ref[...] = acc.astype(y_ref.dtype)            # bf16 intermediate
    # Per-grid-step partial sums only (no cross-step accumulator) so the row
    # axis stays "parallel" (megacore-shardable); the tiny finalize runs in
    # plain JAX.
    s_ref[0] = jnp.sum(acc, axis=0, keepdims=True)
    sq_ref[0] = jnp.sum(acc * acc, axis=0, keepdims=True)


def _bn_gelu_kernel(y_ref, a_ref, b_ref, o_ref):
    # Upcast bf16 y on load; keep all elementwise math in f32 (v5e has no bf16
    # VPU/EUP).  a/b are pre-tiled to lane width -> plain broadcast FMA.
    z = y_ref[...].astype(jnp.float32) * a_ref[...] + b_ref[...]
    o_ref[...] = _gelu_tanh(z)


# ------------------------------- wrapper ------------------------------------

def _build_banded_weight(wt, K, Wp, Wo, Cin, Cout):
    # Equivalent direct-conv weight (K, K, Cin, Cout): spatially flipped
    # conv-transpose weight (valid for stride=1, dilation=1, groups=1).
    w_kkio = jnp.transpose(jnp.flip(wt, axis=(2, 3)),
                           (2, 3, 0, 1)).astype(jnp.float32)
    # Banded B[(kh, wp, ci), (wo, co)] = w[kh, wp - wo, ci, co] (0 outside the
    # band), built with a single vectorized gather + mask.
    kw = jnp.arange(Wp)[:, None] - jnp.arange(Wo)[None, :]          # (Wp, Wo)
    valid = (kw >= 0) & (kw < K)
    kw_c = jnp.where(valid, kw, 0)
    wb = jnp.take(w_kkio, kw_c.reshape(-1), axis=1)     # (K, Wp*Wo, Cin, Cout)
    wb = wb.reshape(K, Wp, Wo, Cin, Cout)
    wb = wb * valid[None, :, :, None, None].astype(jnp.float32)
    wb = jnp.transpose(wb, (0, 1, 3, 2, 4)).reshape(K * Wp * Cin, Wo * Cout)
    return wb.astype(jnp.bfloat16)


def conv_transpose_bn_gelu(x_nchw, wt, bias, gamma, beta, eps=1e-3,
                           fused_max_rows=512):
    """ConvTranspose2d(k=3, s=1, p=1, op=0, d=1, g=1, bias) + BatchNorm2d
    (training-mode batch stats, eps) + GELU.  Returns float32 NCHW."""
    # The conv-transpose bias is a per-channel constant added before a
    # training-mode BatchNorm, so it cancels exactly in the forward output.
    del bias
    # TODO(synk): BatchNorm running_mean/running_var training-time buffer
    # updates are not reproduced (forward output only); with the bias folded
    # out those running stats would also differ even though the output is
    # identical.
    N, Cin, H, W = x_nchw.shape
    Cin_w, Cout, K, _ = wt.shape
    assert Cin == Cin_w
    stride, padding, dilation = 1, 1, 1
    pad_eff = dilation * (K - 1) - padding                          # = 1
    Ho = (H - 1) * stride - 2 * padding + dilation * (K - 1) + 1    # = H
    Wo = (W - 1) * stride - 2 * padding + dilation * (K - 1) + 1    # = W
    Wp = W + 2 * pad_eff
    KWC = K * Wp * Cin
    L = Wo * Cout
    M = N * Ho
    count = float(M * Wo)            # elements per channel for batch stats

    # bf16 MXU operands (f32 accumulation happens in-kernel).
    x_pad = jnp.pad(
        jnp.transpose(x_nchw, (0, 2, 3, 1)).astype(jnp.bfloat16),
        ((0, 0), (pad_eff, pad_eff), (pad_eff, pad_eff), (0, 0)))
    # Row slab A[(n, ho), (kh, wp, ci)] = x_pad[n, ho+kh, wp, ci].
    # TODO(synk): the K-fold copy of x_pad could be removed entirely with a kh
    # grid axis + element-offset / manual DMA over x_pad; here it is at least
    # half the f32 traffic via bf16.
    a = jnp.stack([x_pad[:, kh:kh + Ho] for kh in range(K)], axis=2)
    a = a.reshape(M, KWC)

    wb = _build_banded_weight(wt, K, Wp, Wo, Cin, Cout)

    fused_bytes = (M * KWC + KWC * L) * 2 + L * L * 4 + M * L * 8
    if M <= fused_max_rows and fused_bytes <= 24 * 1024 * 1024:
        # ---- Fused single-pass path (the tested shape lands here) ----
        lane = jnp.arange(L)
        p_mat = (lane[:, None] % Cout == lane[None, :] % Cout).astype(
            jnp.float32)
        gamma_lane = jnp.tile(gamma.astype(jnp.float32), Wo).reshape(1, L)
        beta_lane = jnp.tile(beta.astype(jnp.float32), Wo).reshape(1, L)
        cost = pl.CostEstimate(
            flops=2 * M * KWC * L + 4 * L * L + 10 * M * L,
            transcendentals=M * L,
            bytes_accessed=2 * (M * KWC + KWC * L)
                           + 4 * (L * L + 2 * L + M * L))
        out_flat = pl.pallas_call(
            _make_fused_kernel(1.0 / count, eps),
            out_shape=jax.ShapeDtypeStruct((M, L), jnp.float32),
            grid=(1,),
            in_specs=[
                pl.BlockSpec((M, KWC), lambda i: (0, 0)),
                pl.BlockSpec((KWC, L), lambda i: (0, 0)),
                pl.BlockSpec((L, L), lambda i: (0, 0)),
                pl.BlockSpec((1, L), lambda i: (0, 0)),
                pl.BlockSpec((1, L), lambda i: (0, 0)),
            ],
            out_specs=pl.BlockSpec((M, L), lambda i: (0, 0)),
            compiler_params=pltpu.CompilerParams(
                dimension_semantics=("arbitrary",)),
            cost_estimate=cost,
        )(a, wb, p_mat, gamma_lane, beta_lane)
    else:
        # ---- Tiled two-pass path for large M ----
        tm = 512 if M >= 1024 else 256
        n_tiles = pl.cdiv(M, tm)
        if n_tiles % 2:              # even tile count -> both v7x TCs busy
            n_tiles += 1
        m_pad = n_tiles * tm
        a_p = jnp.pad(a, ((0, m_pad - M), (0, 0)))
        cost = pl.CostEstimate(
            flops=2 * m_pad * KWC * L,
            transcendentals=0,
            bytes_accessed=2 * (m_pad * KWC + KWC * L + m_pad * L)
                           + 4 * 2 * n_tiles * L)
        y, s_parts, sq_parts = pl.pallas_call(
            _conv_stats_kernel,
            out_shape=(
                jax.ShapeDtypeStruct((m_pad, L), jnp.bfloat16),
                jax.ShapeDtypeStruct((n_tiles, 1, L), jnp.float32),
                jax.ShapeDtypeStruct((n_tiles, 1, L), jnp.float32),
            ),
            grid=(n_tiles,),
            in_specs=[
                pl.BlockSpec((tm, KWC), lambda i: (i, 0)),
                # Constant-index weight block.  If the banded weight grows
                # near the v7x 64 MiB VMEM budget, add
                # pipeline_mode=pl.Buffered(1) here and tile L with a second
                # grid axis.
                pl.BlockSpec((KWC, L), lambda i: (0, 0)),
            ],
            out_specs=(
                pl.BlockSpec((tm, L), lambda i: (i, 0)),
                pl.BlockSpec((1, 1, L), lambda i: (i, 0, 0)),
                pl.BlockSpec((1, 1, L), lambda i: (i, 0, 0)),
            ),
            compiler_params=pltpu.CompilerParams(
                dimension_semantics=("parallel",),
                vmem_limit_bytes=48 * 1024 * 1024),
            cost_estimate=cost,
        )(a_p, wb)

        # Finalize training-mode BatchNorm (biased batch variance) in plain
        # JAX: a tiny (n_tiles, Wo, Cout) reduction.  Padded zero rows add
        # nothing to the sums; `count` is the true element count.
        s = s_parts.reshape(-1, Wo, Cout).sum(axis=(0, 1))
        sq = sq_parts.reshape(-1, Wo, Cout).sum(axis=(0, 1))
        mean = s / count
        var = jnp.maximum(sq / count - mean * mean, 0.0)
        a_ch = gamma.astype(jnp.float32) / jnp.sqrt(var + eps)
        b_ch = beta.astype(jnp.float32) - mean * a_ch
        a_lane = jnp.tile(a_ch, Wo).reshape(1, L)
        b_lane = jnp.tile(b_ch, Wo).reshape(1, L)

        out_flat = pl.pallas_call(
            _bn_gelu_kernel,
            out_shape=jax.ShapeDtypeStruct((m_pad, L), jnp.float32),
            grid=(n_tiles,),
            in_specs=[
                pl.BlockSpec((tm, L), lambda i: (i, 0)),
                pl.BlockSpec((1, L), lambda i: (0, 0)),
                pl.BlockSpec((1, L), lambda i: (0, 0)),
            ],
            out_specs=pl.BlockSpec((tm, L), lambda i: (i, 0)),
            compiler_params=pltpu.CompilerParams(
                dimension_semantics=("parallel",)),
            cost_estimate=pl.CostEstimate(
                flops=8 * m_pad * L, transcendentals=m_pad * L,
                bytes_accessed=2 * m_pad * L + 4 * (m_pad * L + 2 * L)),
        )(y, a_lane, b_lane)
        out_flat = out_flat[:M]

    out_nhwc = out_flat.reshape(N, Ho, Wo, Cout)
    # Module semantics require NCHW; a layout-aware consumer could take the
    # NHWC slab directly and skip this extra HBM pass.
    return jnp.transpose(out_nhwc, (0, 3, 1, 2))


# --------------------------- pure-JAX reference -----------------------------

def reference(x_nchw, wt, bias, gamma, beta, eps=1e-3):
    K = wt.shape[2]
    pad_eff = (K - 1) - 1
    w_oihw = jnp.transpose(jnp.flip(wt, axis=(2, 3)), (1, 0, 2, 3))
    y = jax.lax.conv_general_dilated(
        x_nchw.astype(jnp.float32), w_oihw.astype(jnp.float32),
        window_strides=(1, 1), padding=[(pad_eff, pad_eff)] * 2,
        dimension_numbers=("NCHW", "OIHW", "NCHW"),
        precision=jax.lax.Precision.HIGHEST)
    y = y + bias[None, :, None, None]
    mean = y.mean(axis=(0, 2, 3), keepdims=True)
    var = y.var(axis=(0, 2, 3), keepdims=True)          # biased (training BN)
    z = (y - mean) / jnp.sqrt(var + eps)
    z = z * gamma[None, :, None, None] + beta[None, :, None, None]
    return z * 0.5 * (1.0 + jax.scipy.special.erf(z / jnp.sqrt(2.0)))


# --------------------------------- main --------------------------------------

if __name__ == "__main__":
    N, Cin, Cout, H, W, K = 2, 4, 8, 16, 16, 3

    key = jax.random.PRNGKey(0)
    kx, kw, kb, kg, kbeta = jax.random.split(key, 5)
    x = jax.random.normal(kx, (N, Cin, H, W), dtype=jnp.float32)
    # ConvTranspose2d weight shape: (in_channels, out_channels, K, K)
    fan_in = Cin * K * K
    bound = 1.0 / math.sqrt(fan_in)
    wt = jax.random.uniform(kw, (Cin, Cout, K, K), jnp.float32, -bound, bound)
    bias = jax.random.uniform(kb, (Cout,), jnp.float32, -bound, bound)
    gamma = 1.0 + 0.1 * jax.random.normal(kg, (Cout,), dtype=jnp.float32)
    beta = 0.1 * jax.random.normal(kbeta, (Cout,), dtype=jnp.float32)

    out = jax.jit(conv_transpose_bn_gelu)(x, wt, bias, gamma, beta)
    out = jax.block_until_ready(out)

    assert out.shape == (N, Cout, H, W), out.shape
    assert jnp.all(jnp.isfinite(out))

    # Check 1: against the exact-f32 erf-GELU reference.  The gap is dominated
    # by the deliberate bf16 quantization of the MXU operands (~1e-2 worst
    # case after BN normalization), so use a matching tolerance.
    ref_f32 = jax.block_until_ready(reference(x, wt, bias, gamma, beta))
    assert jnp.allclose(out, ref_f32, rtol=2e-2, atol=2e-2), (
        float(jnp.max(jnp.abs(out - ref_f32))))

    # Check 2: same-quantization reference (bf16 conv inputs, everything else
    # exact f32).  Isolates the kernel's own error (accumulation order, folded
    # BN, tanh-form GELU) at a tight tolerance.
    xq = x.astype(jnp.bfloat16).astype(jnp.float32)
    wq = wt.astype(jnp.bfloat16).astype(jnp.float32)
    ref_q = jax.block_until_ready(reference(xq, wq, bias, gamma, beta))
    assert jnp.allclose(out, ref_q, rtol=5e-3, atol=5e-3), (
        float(jnp.max(jnp.abs(out - ref_q))))

    print("KERNEL_OK")
</pallas_src>

<mosaic_0001>
module attributes {stable_mosaic.version = 11 : i64} {
  func.func @kernel(%arg0: i32, %arg1: memref<32x216xbf16, #tpu.memory_space<vmem>>, %arg2: memref<216x128xbf16, #tpu.memory_space<vmem>>, %arg3: memref<128x128xf32, #tpu.memory_space<vmem>>, %arg4: memref<1x128xf32, #tpu.memory_space<vmem>>, %arg5: memref<1x128xf32, #tpu.memory_space<vmem>>, %arg6: memref<32x128xf32, #tpu.memory_space<vmem>>) attributes {dimension_semantics = [#tpu.dimension_semantics<arbitrary>], iteration_bounds = array<i64: 1>, scalar_prefetch = 0 : i64, scratch_operands = 0 : i64, tpu.core_type = #tpu.core_type<tc>, window_params = [{pipeline_mode = #tpu.pipeline_mode<synchronous>, transform_indices = @transform_0, window_bounds = array<i64: 32, 216>}, {pipeline_mode = #tpu.pipeline_mode<synchronous>, transform_indices = @transform_1, window_bounds = array<i64: 216, 128>}, {pipeline_mode = #tpu.pipeline_mode<synchronous>, transform_indices = @transform_2, window_bounds = array<i64: 128, 128>}, {pipeline_mode = #tpu.pipeline_mode<synchronous>, transform_indices = @transform_3, window_bounds = array<i64: 1, 128>}, {pipeline_mode = #tpu.pipeline_mode<synchronous>, transform_indices = @transform_4, window_bounds = array<i64: 1, 128>}, {pipeline_mode = #tpu.pipeline_mode<synchronous>, transform_indices = @transform_5, window_bounds = array<i64: 32, 128>}]} {
    %c0 = arith.constant 0 : index
    %c0_0 = arith.constant 0 : index
    %0 = vector.load %arg1[%c0, %c0_0] : memref<32x216xbf16, #tpu.memory_space<vmem>>, vector<32x216xbf16>
    %c0_1 = arith.constant 0 : index
    %c0_2 = arith.constant 0 : index
    %1 = vector.load %arg2[%c0_1, %c0_2] : memref<216x128xbf16, #tpu.memory_space<vmem>>, vector<216x128xbf16>
    %cst = arith.constant dense<0.000000e+00> : vector<32x128xf32>
    %2 = tpu.matmul %0, %1, %cst {dimension_numbers = #tpu.dot_dimension_numbers<[1], [0], [0], [1], [0, 0, 1, 1], [], []>} : vector<32x216xbf16>, vector<216x128xbf16>, vector<32x128xf32> -> vector<32x128xf32>
    %cst_3 = arith.constant dense<0.000000e+00> : vector<128xf32>
    %3 = vector.multi_reduction <add>, %2, %cst_3 [0] : vector<32x128xf32> to vector<128xf32>
    %4 = vector.shape_cast %3 : vector<128xf32> to vector<1x128xf32>
    %5 = arith.mulf %2, %2 : vector<32x128xf32>
    %cst_4 = arith.constant dense<0.000000e+00> : vector<128xf32>
    %6 = vector.multi_reduction <add>, %5, %cst_4 [0] : vector<32x128xf32> to vector<128xf32>
    %7 = vector.shape_cast %6 : vector<128xf32> to vector<1x128xf32>
    %c0_5 = arith.constant 0 : index
    %c0_6 = arith.constant 0 : index
    %8 = vector.load %arg3[%c0_5, %c0_6] : memref<128x128xf32, #tpu.memory_space<vmem>>, vector<128x128xf32>
    %cst_7 = arith.constant dense<0.000000e+00> : vector<1x128xf32>
    %9 = tpu.matmul %4, %8, %cst_7 {dimension_numbers = #tpu.dot_dimension_numbers<[1], [0], [0], [1], [0, 0, 1, 1], [], []>} : vector<1x128xf32>, vector<128x128xf32>, vector<1x128xf32> -> vector<1x128xf32>
    %c0_8 = arith.constant 0 : index
    %c0_9 = arith.constant 0 : index
    %10 = vector.load %arg3[%c0_8, %c0_9] : memref<128x128xf32, #tpu.memory_space<vmem>>, vector<128x128xf32>
    %cst_10 = arith.constant dense<0.000000e+00> : vector<1x128xf32>
    %11 = tpu.matmul %7, %10, %cst_10 {dimension_numbers = #tpu.dot_dimension_numbers<[1], [0], [0], [1], [0, 0, 1, 1], [], []>} : vector<1x128xf32>, vector<128x128xf32>, vector<1x128xf32> -> vector<1x128xf32>
    %cst_11 = arith.constant 0.001953125 : f32
    %12 = vector.broadcast %cst_11 : f32 to vector<1x128xf32>
    %13 = arith.mulf %9, %12 : vector<1x128xf32>
    %cst_12 = arith.constant 0.001953125 : f32
    %14 = vector.broadcast %cst_12 : f32 to vector<1x128xf32>
    %15 = arith.mulf %11, %14 : vector<1x128xf32>
    %16 = arith.mulf %13, %13 : vector<1x128xf32>
    %17 = arith.subf %15, %16 : vector<1x128xf32>
    %cst_13 = arith.constant 0.000000e+00 : f32
    %18 = vector.broadcast %cst_13 : f32 to vector<1x128xf32>
    %19 = arith.maximumf %17, %18 : vector<1x128xf32>
    %c0_14 = arith.constant 0 : index
    %c0_15 = arith.constant 0 : index
    %20 = vector.load %arg4[%c0_14, %c0_15] : memref<1x128xf32, #tpu.memory_space<vmem>>, vector<1x128xf32>
    %cst_16 = arith.constant 1.000000e-03 : f32
    %21 = vector.broadcast %cst_16 : f32 to vector<1x128xf32>
    %22 = arith.addf %19, %21 : vector<1x128xf32>
    %23 = math.rsqrt %22 : vector<1x128xf32>
    %24 = arith.mulf %20, %23 : vector<1x128xf32>
    %c0_17 = arith.constant 0 : index
    %c0_18 = arith.constant 0 : index
    %25 = vector.load %arg5[%c0_17, %c0_18] : memref<1x128xf32, #tpu.memory_space<vmem>>, vector<1x128xf32>
    %26 = arith.mulf %13, %24 : vector<1x128xf32>
    %27 = arith.subf %25, %26 : vector<1x128xf32>
    %28 = vector.broadcast %24 : vector<1x128xf32> to vector<32x128xf32>
    %29 = arith.mulf %2, %28 : vector<32x128xf32>
    %30 = vector.broadcast %27 : vector<1x128xf32> to vector<32x128xf32>
    %31 = arith.addf %29, %30 : vector<32x128xf32>
    %32 = arith.mulf %31, %31 : vector<32x128xf32>
    %33 = arith.mulf %32, %31 : vector<32x128xf32>
    %cst_19 = arith.constant 4.471500e-02 : f32
    %34 = vector.broadcast %cst_19 : f32 to vector<32x128xf32>
    %35 = arith.mulf %34, %33 : vector<32x128xf32>
    %36 = arith.addf %31, %35 : vector<32x128xf32>
    %cst_20 = arith.constant 0.797884583 : f32
    %37 = vector.broadcast %cst_20 : f32 to vector<32x128xf32>
    %38 = arith.mulf %37, %36 : vector<32x128xf32>
    %cst_21 = arith.constant 5.000000e-01 : f32
    %39 = vector.broadcast %cst_21 : f32 to vector<32x128xf32>
    %40 = arith.mulf %39, %31 : vector<32x128xf32>
    %41 = math.tanh %38 : vector<32x128xf32>
    %cst_22 = arith.constant 1.000000e+00 : f32
    %42 = vector.broadcast %cst_22 : f32 to vector<32x128xf32>
    %43 = arith.addf %42, %41 : vector<32x128xf32>
    %44 = arith.mulf %40, %43 : vector<32x128xf32>
    %c0_23 = arith.constant 0 : index
    %c0_24 = arith.constant 0 : index
    %45 = vector.load %arg6[%c0_23, %c0_24] : memref<32x128xf32, #tpu.memory_space<vmem>>, vector<32x128xf32>
    tpu.vector_store %arg6[%c0_23, %c0_24], %44 {strides = array<i32>} : memref<32x128xf32, #tpu.memory_space<vmem>>, vector<32x128xf32>,
    return
  }
  func.func @transform_0(%arg0: i32) -> (i32, i32) {
    %c0_i32 = arith.constant 0 : i32
    %c0_i32_0 = arith.constant 0 : i32
    %c0_i32_1 = arith.constant 0 : i32
    return %c0_i32, %c0_i32_0 : i32, i32
  }
  func.func @transform_1(%arg0: i32) -> (i32, i32) {
    %c0_i32 = arith.constant 0 : i32
    %c0_i32_0 = arith.constant 0 : i32
    %c0_i32_1 = arith.constant 0 : i32
    return %c0_i32, %c0_i32_0 : i32, i32
  }
  func.func @transform_2(%arg0: i32) -> (i32, i32) {
    %c0_i32 = arith.constant 0 : i32
    %c0_i32_0 = arith.constant 0 : i32
    %c0_i32_1 = arith.constant 0 : i32
    return %c0_i32, %c0_i32_0 : i32, i32
  }
  func.func @transform_3(%arg0: i32) -> (i32, i32) {
    %c0_i32 = arith.constant 0 : i32
    %c0_i32_0 = arith.constant 0 : i32
    %c0_i32_1 = arith.constant 0 : i32
    return %c0_i32, %c0_i32_0 : i32, i32
  }
  func.func @transform_4(%arg0: i32) -> (i32, i32) {
    %c0_i32 = arith.constant 0 : i32
    %c0_i32_0 = arith.constant 0 : i32
    %c0_i32_1 = arith.constant 0 : i32
    return %c0_i32, %c0_i32_0 : i32, i32
  }
  func.func @transform_5(%arg0: i32) -> (i32, i32) {
    %c0_i32 = arith.constant 0 : i32
    %c0_i32_0 = arith.constant 0 : i32
    %c0_i32_1 = arith.constant 0 : i32
    return %c0_i32, %c0_i32_0 : i32, i32
  }
}

</mosaic_0001>

<llo_original>
// kernel: tile.13
$region0: #{tile.13}
  #allocation0 [shape = 's32[1]{0}', space=sflag, size = 0x4, scoped, tag = 'scoped memory for tile.13']
  %s0 = inlined_call_operand.vmem [shape: f32[8], index: 0, kind: input, shape index: {}]
  %s1 = inlined_call_operand.vmem [shape: f32[16,8], index: 1, kind: output, shape index: {}]
  // Predicated region
  $region2: #{tile.13} parent=0 // pred_check
    _
  $region3: #{tile.13} parent=0 // pred_check_branch
    %3 = sbr.rel (0) target = $region5
  $region4: #{tile.13} parent=0 // pred_region
    _
  $region5: #{tile.13} parent=0 // pred_fallthru
    _
  %v4 = vld [vmem:[%s0] ss:$0 sm:$0xff]
  %5 = vst [vmem:[%s1] sm:$0xff] %v4
  %s6 = scalar_lea.vmem %s1, 8
  %7 = vst [vmem:[%s6] sm:$0xff] %v4

// kernel: tile.14
$region0: #{tile.14}
  %s0 = inlined_call_operand.vmem [shape: f32[16,8], index: 0, kind: input, shape index: {}]
  %s1 = inlined_call_operand.vmem [shape: f32[1,128], index: 1, kind: output, shape index: {}]
  $region1: #{tile.14} parent=0
    #allocation0 [shape = 'u8[4096]{0}', space=vmem, size = 0x1000, scoped, tag = 'scoped mem for output reshape']
    %v2 = vld [vmem:[%s0] sm:$0x1]
    %vm3 = vcmask 64512
    %4 = vst.msk [vmem:[#allocation0] sm:$0x1] %vm3, %v2
    %s5 = scalar_lea.vmem %s0, 15
    %v6 = vld [vmem:[%s5] sm:$0x1]
    %7 = vrot.lane.b32.xlu0 %v6, 120
    %v8 = vpop.permute.xlu0 %7
    %vm9 = vcmask 1048512
    %10 = vst.msk [vmem:[#allocation0] sm:$0x1] %vm9, %v8
    %s11 = scalar_lea.vmem %s0, 14
    %v12 = vld [vmem:[%s11] sm:$0x1]
    %13 = vrot.lane.b32.xlu0 %v12, 112
    %v14 = vpop.permute.xlu0 %13
    %vm15 = vcmask 982912
    %16 = vst.msk [vmem:[#allocation0] sm:$0x1] %vm15, %v14
    %s17 = scalar_lea.vmem %s0, 13
    %v18 = vld [vmem:[%s17] sm:$0x1]
    %19 = vrot.lane.b32.xlu0 %v18, 104
    %v20 = vpop.permute.xlu0 %19
    %vm21 = vcmask 917312
    %22 = vst.msk [vmem:[#allocation0] sm:$0x1] %vm21, %v20
    %s23 = scalar_lea.vmem %s0, 12
    %v24 = vld [vmem:[%s23] sm:$0x1]
    %25 = vrot.lane.b32.xlu0 %v24, 96
    %v26 = vpop.permute.xlu0 %25
    %vm27 = vcmask 851712
    %28 = vst.msk [vmem:[#allocation0] sm:$0x1] %vm27, %v26
    %s29 = scalar_lea.vmem %s0, 11
    %v30 = vld [vmem:[%s29] sm:$0x1]
    %31 = vrot.lane.b32.xlu0 %v30, 88
    %v32 = vpop.permute.xlu0 %31
    %vm33 = vcmask 786112
    %34 = vst.msk [vmem:[#allocation0] sm:$0x1] %vm33, %v32
    %s35 = scalar_lea.vmem %s0, 10
    %v36 = vld [vmem:[%s35] sm:$0x1]
    %37 = vrot.lane.b32.xlu0 %v36, 80
    %v38 = vpop.permute.xlu0 %37
    %vm39 = vcmask 720512
    %40 = vst.msk [vmem:[#allocation0] sm:$0x1] %vm39, %v38
    %s41 = scalar_lea.vmem %s0, 9
    %v42 = vld [vmem:[%s41] sm:$0x1]
    %43 = vrot.lane.b32.xlu0 %v42, 72
    %v44 = vpop.permute.xlu0 %43
    %vm45 = vcmask 654912
    %46 = vst.msk [vmem:[#allocation0] sm:$0x1] %vm45, %v44
    %s47 = scalar_lea.vmem %s0, 8
    %v48 = vld [vmem:[%s47] sm:$0x1]
    %49 = vrot.lane.b32.xlu0 %v48, 64
    %v50 = vpop.permute.xlu0 %49
    %vm51 = vcmask 589312
    %52 = vst.msk [vmem:[#allocation0] sm:$0x1] %vm51, %v50
    %s53 = scalar_lea.vmem %s0, 7
    %v54 = vld [vmem:[%s53] sm:$0x1]
    %55 = vrot.lane.b32.xlu0 %v54, 56
    %v56 = vpop.permute.xlu0 %55
    %vm57 = vcmask 523712
    %58 = vst.msk [vmem:[#allocation0] sm:$0x1] %vm57, %v56
    %s59 = scalar_lea.vmem %s0, 6
    %v60 = vld [vmem:[%s59] sm:$0x1]
    %61 = vrot.lane.b32.xlu0 %v60, 48
    %v62 = vpop.permute.xlu0 %61
    %vm63 = vcmask 458112
    %64 = vst.msk [vmem:[#allocation0] sm:$0x1] %vm63, %v62
    %s65 = scalar_lea.vmem %s0, 5
    %v66 = vld [vmem:[%s65] sm:$0x1]
    %67 = vrot.lane.b32.xlu0 %v66, 40
    %v68 = vpop.permute.xlu0 %67
    %vm69 = vcmask 392512
    %70 = vst.msk [vmem:[#allocation0] sm:$0x1] %vm69, %v68
    %s71 = scalar_lea.vmem %s0, 4
    %v72 = vld [vmem:[%s71] sm:$0x1]
    %73 = vrot.lane.b32.xlu0 %v72, 32
    %v74 = vpop.permute.xlu0 %73
    %vm75 = vcmask 326912
    %76 = vst.msk [vmem:[#allocation0] sm:$0x1] %vm75, %v74
    %s77 = scalar_lea.vmem %s0, 3
    %v78 = vld [vmem:[%s77] sm:$0x1]
    %79 = vrot.lane.b32.xlu0 %v78, 24
    %v80 = vpop.permute.xlu0 %79
    %vm81 = vcmask 261312
    %82 = vst.msk [vmem:[#allocation0] sm:$0x1] %vm81, %v80
    %s83 = scalar_lea.vmem %s0, 2
    %v84 = vld [vmem:[%s83] sm:$0x1]
    %85 = vrot.lane.b32.xlu0 %v84, 16
    %v86 = vpop.permute.xlu0 %85
    %vm87 = vcmask 195712
    %88 = vst.msk [vmem:[#allocation0] sm:$0x1] %vm87, %v86
    %s89 = scalar_lea.vmem %s0, 1
    %v90 = vld [vmem:[%s89] sm:$0x1]
    %91 = vrot.lane.b32.xlu0 %v90, 8
    %v92 = vpop.permute.xlu0 %91
    %vm93 = vcmask 130112
    %94 = vst.msk [vmem:[#allocation0] sm:$0x1] %vm93, %v92
    %s96 = sshllo.u32 0, 1
    %v98 = vld [vmem:[#allocation0] sm:%s96]
    %s99 = sshllo.u32 0, 1
    %100 = vst [vmem:[%s1] sm:%s99] %v98

// kernel: conv_transpose_bn_gelu.1
$region0: #{conv_transpose_bn_gelu.1}
  #allocation0 [shape = 'u32[]', space=smem, size = 0x4, offset = 0x4, fixed_abs, tag = 'smem constant byte address 0x4 - core index']
  #allocation1 [shape = 'u32[144,128]{1,0:T(1,128)}', space=vmem, size = 0x12000, scoped, tag = 'internal scratch']
  %s0 = inlined_call_operand.vmem [shape: bf16[32,216], index: 0, kind: input, shape index: {}]
  %s1 = inlined_call_operand.vmem [shape: bf16[216,128], index: 1, kind: input, shape index: {}]
  %s2 = inlined_call_operand.vmem [shape: f32[128,128], index: 2, kind: input, shape index: {}]
  %s3 = inlined_call_operand.vmem [shape: f32[1,128], index: 3, kind: input, shape index: {}]
  %s4 = inlined_call_operand.vmem [shape: f32[1,128], index: 4, kind: input, shape index: {}]
  %s5 = inlined_call_operand.vmem [shape: f32[32,128], index: 5, kind: output, shape index: {}]
  %s6 = sld [smem:[#allocation0]]
  $region30: #{conv_transpose_bn_gelu.1} parent=0
    _
  %s8 = ssub.s32 1, %s6
  %s9 = scalar_select 0, %s8, %s6
  // Predicated region
  $region2: #{conv_transpose_bn_gelu.1} parent=0 // pred_check
    _
  $region3: #{conv_transpose_bn_gelu.1} parent=0 // pred_check_branch
    %11 = sbr.rel (0) target = $region5
  $region4: #{conv_transpose_bn_gelu.1} parent=0 // pred_region
    _
  $region5: #{conv_transpose_bn_gelu.1} parent=0 // pred_fallthru
    _
  // Predicated region
  $region6: #{conv_transpose_bn_gelu.1} parent=0 // pred_check
    _
  $region7: #{conv_transpose_bn_gelu.1} parent=0 // pred_check_branch
    %13 = sbr.rel (0) target = $region9
  $region8: #{conv_transpose_bn_gelu.1} parent=0 // pred_region
    _
  $region9: #{conv_transpose_bn_gelu.1} parent=0 // pred_fallthru
    _
  // Predicated region
  $region10: #{conv_transpose_bn_gelu.1} parent=0 // pred_check
    _
  $region11: #{conv_transpose_bn_gelu.1} parent=0 // pred_check_branch
    %15 = sbr.rel (0) target = $region13
  $region12: #{conv_transpose_bn_gelu.1} parent=0 // pred_region
    _
  $region13: #{conv_transpose_bn_gelu.1} parent=0 // pred_fallthru
    _
  // Predicated region
  $region14: #{conv_transpose_bn_gelu.1} parent=0 // pred_check
    _
  $region15: #{conv_transpose_bn_gelu.1} parent=0 // pred_check_branch
    %17 = sbr.rel (0) target = $region17
  $region16: #{conv_transpose_bn_gelu.1} parent=0 // pred_region
    _
  $region17: #{conv_transpose_bn_gelu.1} parent=0 // pred_fallthru
    _
  // Predicated region
  $region18: #{conv_transpose_bn_gelu.1} parent=0 // pred_check
    _
  $region19: #{conv_transpose_bn_gelu.1} parent=0 // pred_check_branch
    %19 = sbr.rel (0) target = $region21
  $region20: #{conv_transpose_bn_gelu.1} parent=0 // pred_region
    _
  $region21: #{conv_transpose_bn_gelu.1} parent=0 // pred_fallthru
    _
  %v21 = vld [vmem:[%s0] sm:$0xff]
  %v22 = vld [vmem:[%s0 + $0x8] sm:$0xff]
  %v23 = vld [vmem:[%s0 + $0x10] sm:$0xff]
  %v24 = vld [vmem:[%s0 + $0x18] sm:$0xff]
  %v25 = vld [vmem:[%s1] sm:$0xf]
  %v26 = vld [vmem:[%s1 + $0x4] sm:$0xf]
  %v27 = vld [vmem:[%s1 + $0x8] sm:$0xf]
  %v28 = vld [vmem:[%s1 + $0xc] sm:$0xf]
  %v29 = vld [vmem:[%s1 + $0x10] sm:$0xf]
  %v30 = vld [vmem:[%s1 + $0x14] sm:$0xf]
  %v31 = vld [vmem:[%s1 + $0x18] sm:$0xf]
  %v32 = vld [vmem:[%s1 + $0x1c] sm:$0xf]
  %v33 = vld [vmem:[%s1 + $0x20] sm:$0xf]
  %v34 = vld [vmem:[%s1 + $0x24] sm:$0xf]
  %v35 = vld [vmem:[%s1 + $0x28] sm:$0xf]
  %v36 = vld [vmem:[%s1 + $0x2c] sm:$0xf]
  %v37 = vld [vmem:[%s1 + $0x30] sm:$0xf]
  %v38 = vld [vmem:[%s1 + $0x34] sm:$0xf]
  %v39 = vld [vmem:[%s1 + $0x38] sm:$0xf]
  %v40 = vld [vmem:[%s1 + $0x3c] sm:$0xf]
  %v41 = vld [vmem:[%s1 + $0x40] sm:$0xf]
  %v42 = vld [vmem:[%s1 + $0x44] sm:$0xf]
  %v43 = vld [vmem:[%s1 + $0x48] sm:$0xf]
  %v44 = vld [vmem:[%s1 + $0x4c] sm:$0xf]
  %v45 = vld [vmem:[%s1 + $0x50] sm:$0xf]
  %v46 = vld [vmem:[%s1 + $0x54] sm:$0xf]
  %v47 = vld [vmem:[%s1 + $0x58] sm:$0xf]
  %v48 = vld [vmem:[%s1 + $0x5c] sm:$0xf]
  %v49 = vld [vmem:[%s1 + $0x60] sm:$0xf]
  %v50 = vld [vmem:[%s1 + $0x64] sm:$0xf]
  %v51 = vld [vmem:[%s1 + $0x68] sm:$0xf]
  %v56 = vunpack.c.l.b16 %v21
  %v57 = vunpack.c.h.b16 %v21
  %v58 = vunpack.c.l.b16 %v22
  %v59 = vunpack.c.h.b16 %v22
  %v60 = vunpack.c.l.b16 %v23
  %v61 = vunpack.c.h.b16 %v23
  %v62 = vunpack.c.l.b16 %v24
  %v63 = vunpack.c.h.b16 %v24
  %v64 = vpack.c.b16 %v58, %v56
  %v65 = vpack.c.b16 %v59, %v57
  %v66 = vpack.c.b16 %v62, %v60
  %v67 = vpack.c.b16 %v63, %v61
  %v97 = vunpack.c.l.b16 %v25
  %v98 = vunpack.c.l.b16 %v26
  %v99 = vunpack.c.l.b16 %v27
  %v100 = vunpack.c.l.b16 %v28
  %v101 = vunpack.c.l.b16 %v29
  %v102 = vunpack.c.l.b16 %v30
  %v103 = vunpack.c.l.b16 %v31
  %v104 = vunpack.c.l.b16 %v32
  %v105 = vunpack.c.l.b16 %v33
  %v106 = vunpack.c.l.b16 %v34
  %v107 = vunpack.c.l.b16 %v35
  %v108 = vunpack.c.l.b16 %v36
  %v109 = vunpack.c.l.b16 %v37
  %v110 = vunpack.c.l.b16 %v38
  %v111 = vunpack.c.l.b16 %v39
  %v112 = vunpack.c.l.b16 %v40
  %v113 = vunpack.c.l.b16 %v41
  %v114 = vunpack.c.l.b16 %v42
  %v115 = vunpack.c.l.b16 %v43
  %v116 = vunpack.c.l.b16 %v44
  %v117 = vunpack.c.l.b16 %v45
  %v118 = vunpack.c.l.b16 %v46
  %v119 = vunpack.c.l.b16 %v47
  %v120 = vunpack.c.l.b16 %v48
  %v121 = vunpack.c.l.b16 %v49
  %v122 = vunpack.c.l.b16 %v50
  %v123 = vunpack.c.l.b16 %v51
  %v124 = vpack.c.b16 %v98, %v97
  %v125 = vpack.c.b16 %v100, %v99
  %v126 = vpack.c.b16 %v102, %v101
  %v127 = vpack.c.b16 %v104, %v103
  %v128 = vpack.c.b16 %v106, %v105
  %v129 = vpack.c.b16 %v108, %v107
  %v130 = vpack.c.b16 %v110, %v109
  %v131 = vpack.c.b16 %v112, %v111
  %v132 = vpack.c.b16 %v114, %v113
  %v133 = vpack.c.b16 %v116, %v115
  %v134 = vpack.c.b16 %v118, %v117
  %v135 = vpack.c.b16 %v120, %v119
  %v136 = vpack.c.b16 %v122, %v121
  %v137 = vpack.c.b16 %v123, %v123
  %vm151 = vcmask 719872
  %v153 = vsel %vm151, %v65, 0
  %v156 = vsel %vm151, %v67, 0
  %vm158 = vcmask 1043456
  %v160 = vsel %vm158, %v137, 0
  %162 = vmatprep.subr.bf16.mxu0 0
  %163 = vmatpush1.bf16.msra.mxu0 %v124
  %164 = vmatprep.subr.bf16.mxu0 0
  %165 = vmatpush1.bf16.msra.mxu0 %v125
  %166 = vmatprep.subr.bf16.mxu0 0
  %167 = vmatpush1.bf16.msra.mxu0 %v126
  %168 = vmatprep.subr.bf16.mxu0 0
  %169 = vmatpush1.bf16.msra.mxu0 %v127
  %170 = vmatprep.subr.bf16.mxu0 0
  %171 = vmatpush1.bf16.msra.mxu0 %v128
  %172 = vmatprep.subr.bf16.mxu0 0
  %173 = vmatpush1.bf16.msra.mxu0 %v129
  %174 = vmatprep.subr.bf16.mxu0 0
  %175 = vmatpush1.bf16.msra.mxu0 %v130
  %176 = vmatprep.subr.bf16.mxu0 0
  %177 = vmatpush1.bf16.msra.mxu0 %v131
  %178 = vmatprep.subr.bf16.mxu0 0
  %179 = vmatpush1.bf16.msra.mxu0 %v132
  %180 = vmatprep.subr.bf16.mxu0 0
  %181 = vmatpush1.bf16.msra.mxu0 %v133
  %182 = vmatprep.subr.bf16.mxu0 0
  %183 = vmatpush1.bf16.msra.mxu0 %v134
  %184 = vmatprep.subr.bf16.mxu0 0
  %185 = vmatpush1.bf16.msra.mxu0 %v135
  %186 = vmatprep.subr.bf16.mxu0 0
  %187 = vmatpush1.bf16.msra.mxu0 %v136
  %188 = vmatprep.subr.bf16.mxu0 0
  %189 = vmatpush1.bf16.msra.mxu0 %v160
  %190 = vmatprep.subr.bf16.mxu0 0
  %191 = vmatpush1.bf16.msra.mxu0 0
  %192 = vmatprep.subr.bf16.mxu0 0
  %193 = vmatpush1.bf16.msra.mxu0 0
  %194 = vmatprep.mubr.bf16.mxu0 %v153
  %195 = vmatmul.mubr.bf16.gmra.mrb[0].mxu0 %v64
  %v196 = vpop.f32.mrb[0].mxu0
  %v197 = vadd.f32 0.0, %v196
  %v198 = vpop.f32.mrb[0].mxu0
  %v199 = vpop.f32.mrb[0].mxu0
  %v200 = vadd.f32 0.0, %v199
  %v201 = vpop.f32.mrb[0].mxu0
  %202 = vmatprep.mubr.bf16.mxu0 %v156
  %203 = vmatmul.mubr.bf16.gmra.mrb[0].mxu0 %v66
  %v204 = vpop.f32.mrb[0].mxu0
  %v205 = vadd.f32 0.0, %v204
  %v206 = vpop.f32.mrb[0].mxu0
  %v207 = vpop.f32.mrb[0].mxu0
  %v208 = vadd.f32 0.0, %v207
  %v209 = vpop.f32.mrb[0].mxu0
  %210 = vdwg.mxu0
  %v211 = vadd.f32 %v197, %v200
  %v212 = vadd.f32 %v211, %v205
  %v213 = vadd.f32 %v212, %v208
  %v214 = vrot.slane %v213, 4
  %v215 = vadd.f32 %v213, %v214
  %v216 = vrot.slane %v215, 2
  %v217 = vadd.f32 %v215, %v216
  %v218 = vrot.slane %v217, 1
  %v219 = vadd.f32 %v217, %v218
  %v220 = vmul.f32 %v197, %v197
  %v221 = vmul.f32 %v200, %v200
  %v222 = vmul.f32 %v205, %v205
  %v223 = vmul.f32 %v208, %v208
  %v224 = vadd.f32 %v220, %v221
  %v225 = vadd.f32 %v224, %v222
  %v226 = vadd.f32 %v225, %v223
  %v227 = vrot.slane %v226, 4
  %v228 = vadd.f32 %v226, %v227
  %v229 = vrot.slane %v228, 2
  %v230 = vadd.f32 %v228, %v229
  %v231 = vrot.slane %v230, 1
  %v232 = vadd.f32 %v230, %v231
  %v233 = vld [vmem:[%s2] sm:$0xff]
  %v234 = vld [vmem:[%s2 + $0x8] sm:$0xff]
  %v235 = vld [vmem:[%s2 + $0x10] sm:$0xff]
  %v236 = vld [vmem:[%s2 + $0x18] sm:$0xff]
  %v237 = vld [vmem:[%s2 + $0x20] sm:$0xff]
  %v238 = vld [vmem:[%s2 + $0x28] sm:$0xff]
  %v239 = vld [vmem:[%s2 + $0x30] sm:$0xff]
  %v240 = vld [vmem:[%s2 + $0x38] sm:$0xff]
  %v241 = vld [vmem:[%s2 + $0x40] sm:$0xff]
  %v242 = vld [vmem:[%s2 + $0x48] sm:$0xff]
  %v243 = vld [vmem:[%s2 + $0x50] sm:$0xff]
  %v244 = vld [vmem:[%s2 + $0x58] sm:$0xff]
  %v245 = vld [vmem:[%s2 + $0x60] sm:$0xff]
  %v246 = vld [vmem:[%s2 + $0x68] sm:$0xff]
  %v247 = vld [vmem:[%s2 + $0x70] sm:$0xff]
  %v248 = vld [vmem:[%s2 + $0x78] sm:$0xff]
  %249 = vmatprep.subr.mxu0 0.0
  %250 = vmatpush1.msra.mxu0 %v233
  %251 = vmatprep.subr.mxu0 0.0
  %252 = vmatpush1.msra.mxu0 %v234
  %253 = vmatprep.subr.mxu0 0.0
  %254 = vmatpush1.msra.mxu0 %v235
  %255 = vmatprep.subr.mxu0 0.0
  %256 = vmatpush1.msra.mxu0 %v236
  %257 = vmatprep.subr.mxu0 0.0
  %258 = vmatpush1.msra.mxu0 %v237
  %259 = vmatprep.subr.mxu0 0.0
  %260 = vmatpush1.msra.mxu0 %v238
  %261 = vmatprep.subr.mxu0 0.0
  %262 = vmatpush1.msra.mxu0 %v239
  %263 = vmatprep.subr.mxu0 0.0
  %264 = vmatpush1.msra.mxu0 %v240
  %265 = vmatprep.subr.mxu0 0.0
  %266 = vmatpush1.msra.mxu0 %v241
  %267 = vmatprep.subr.mxu0 0.0
  %268 = vmatpush1.msra.mxu0 %v242
  %269 = vmatprep.subr.mxu0 0.0
  %270 = vmatpush1.msra.mxu0 %v243
  %271 = vmatprep.subr.mxu0 0.0
  %272 = vmatpush1.msra.mxu0 %v244
  %273 = vmatprep.subr.mxu0 0.0
  %274 = vmatpush1.msra.mxu0 %v245
  %275 = vmatprep.subr.mxu0 0.0
  %276 = vmatpush1.msra.mxu0 %v246
  %277 = vmatprep.subr.mxu0 0.0
  %278 = vmatpush1.msra.mxu0 %v247
  %279 = vmatprep.subr.mxu0 0.0
  %280 = vmatpush1.msra.mxu0 %v248
  %281 = vmatprep.subr.mxu0 0.0
  %282 = vmatpush1.msra.mxu0 0.0
  %283 = vmatprep.subr.mxu0 0.0
  %284 = vmatpush1.msra.mxu0 0.0
  %285 = vmatprep.subr.mxu0 0.0
  %286 = vmatpush1.msra.mxu0 0.0
  %287 = vmatprep.subr.mxu0 0.0
  %288 = vmatpush1.msra.mxu0 0.0
  %289 = vmatprep.subr.mxu0 0.0
  %290 = vmatpush1.msra.mxu0 0.0
  %291 = vmatprep.subr.mxu0 0.0
  %292 = vmatpush1.msra.mxu0 0.0
  %293 = vmatprep.subr.mxu0 0.0
  %294 = vmatpush1.msra.mxu0 0.0
  %295 = vmatprep.subr.mxu0 0.0
  %296 = vmatpush1.msra.mxu0 0.0
  %297 = vmatprep.subr.mxu0 0.0
  %298 = vmatpush1.msra.mxu0 0.0
  %299 = vmatprep.subr.mxu0 0.0
  %300 = vmatpush1.msra.mxu0 0.0
  %301 = vmatprep.subr.mxu0 0.0
  %302 = vmatpush1.msra.mxu0 0.0
  %303 = vmatprep.subr.mxu0 0.0
  %304 = vmatpush1.msra.mxu0 0.0
  %305 = vmatprep.subr.mxu0 0.0
  %306 = vmatpush1.msra.mxu0 0.0
  %307 = vmatprep.subr.mxu0 0.0
  %308 = vmatpush1.msra.mxu0 0.0
  %309 = vmatprep.subr.mxu0 0.0
  %310 = vmatpush1.msra.mxu0 0.0
  %311 = vmatprep.subr.mxu0 0.0
  %312 = vmatpush1.msra.mxu0 0.0
  %313 = vmatprep.mubr.f32.mxu0 0.0
  %314 = vmatmul.mubr.f32.gmra.mrb[0].mxu0 %v219
  %v315 = vpop.f32.mrb[0].mxu0
  %v316 = vadd.f32 0.0, %v315
  %v317 = vpop.f32.mrb[0].mxu0
  %318 = vdwg.mxu0
  %319 = vmatprep.subr.mxu0 0.0
  %320 = vmatpush1.msra.mxu0 %v233
  %321 = vmatprep.subr.mxu0 0.0
  %322 = vmatpush1.msra.mxu0 %v234
  %323 = vmatprep.subr.mxu0 0.0
  %324 = vmatpush1.msra.mxu0 %v235
  %325 = vmatprep.subr.mxu0 0.0
  %326 = vmatpush1.msra.mxu0 %v236
  %327 = vmatprep.subr.mxu0 0.0
  %328 = vmatpush1.msra.mxu0 %v237
  %329 = vmatprep.subr.mxu0 0.0
  %330 = vmatpush1.msra.mxu0 %v238
  %331 = vmatprep.subr.mxu0 0.0
  %332 = vmatpush1.msra.mxu0 %v239
  %333 = vmatprep.subr.mxu0 0.0
  %334 = vmatpush1.msra.mxu0 %v240
  %335 = vmatprep.subr.mxu0 0.0
  %336 = vmatpush1.msra.mxu0 %v241
  %337 = vmatprep.subr.mxu0 0.0
  %338 = vmatpush1.msra.mxu0 %v242
  %339 = vmatprep.subr.mxu0 0.0
  %340 = vmatpush1.msra.mxu0 %v243
  %341 = vmatprep.subr.mxu0 0.0
  %342 = vmatpush1.msra.mxu0 %v244
  %343 = vmatprep.subr.mxu0 0.0
  %344 = vmatpush1.msra.mxu0 %v245
  %345 = vmatprep.subr.mxu0 0.0
  %346 = vmatpush1.msra.mxu0 %v246
  %347 = vmatprep.subr.mxu0 0.0
  %348 = vmatpush1.msra.mxu0 %v247
  %349 = vmatprep.subr.mxu0 0.0
  %350 = vmatpush1.msra.mxu0 %v248
  %351 = vmatprep.subr.mxu0 0.0
  %352 = vmatpush1.msra.mxu0 0.0
  %353 = vmatprep.subr.mxu0 0.0
  %354 = vmatpush1.msra.mxu0 0.0
  %355 = vmatprep.subr.mxu0 0.0
  %356 = vmatpush1.msra.mxu0 0.0
  %357 = vmatprep.subr.mxu0 0.0
  %358 = vmatpush1.msra.mxu0 0.0
  %359 = vmatprep.subr.mxu0 0.0
  %360 = vmatpush1.msra.mxu0 0.0
  %361 = vmatprep.subr.mxu0 0.0
  %362 = vmatpush1.msra.mxu0 0.0
  %363 = vmatprep.subr.mxu0 0.0
  %364 = vmatpush1.msra.mxu0 0.0
  %365 = vmatprep.subr.mxu0 0.0
  %366 = vmatpush1.msra.mxu0 0.0
  %367 = vmatprep.subr.mxu0 0.0
  %368 = vmatpush1.msra.mxu0 0.0
  %369 = vmatprep.subr.mxu0 0.0
  %370 = vmatpush1.msra.mxu0 0.0
  %371 = vmatprep.subr.mxu0 0.0
  %372 = vmatpush1.msra.mxu0 0.0
  %373 = vmatprep.subr.mxu0 0.0
  %374 = vmatpush1.msra.mxu0 0.0
  %375 = vmatprep.subr.mxu0 0.0
  %376 = vmatpush1.msra.mxu0 0.0
  %377 = vmatprep.subr.mxu0 0.0
  %378 = vmatpush1.msra.mxu0 0.0
  %379 = vmatprep.subr.mxu0 0.0
  %380 = vmatpush1.msra.mxu0 0.0
  %381 = vmatprep.subr.mxu0 0.0
  %382 = vmatpush1.msra.mxu0 0.0
  %383 = vmatprep.mubr.f32.mxu0 0.0
  %384 = vmatmul.mubr.f32.gmra.mrb[0].mxu0 %v232
  %v385 = vpop.f32.mrb[0].mxu0
  %v386 = vadd.f32 0.0, %v385
  %v387 = vpop.f32.mrb[0].mxu0
  %388 = vdwg.mxu0
  %v389 = vmul.f32 %v316, 0.001953125
  %v390 = vmul.f32 %v386, 0.001953125
  %v391 = vmul.f32 %v389, %v389
  %v392 = vsub.f32 %v390, %v391
  %v393 = vmax.f32 %v392, 0.0
  %v394 = vld [vmem:[%s3] sm:$0x1]
  %v395 = vadd.f32 %v393, 0.001
  %v396 = vrsqrt.pop %v395
  %v397 = vmul.f32 %v394, %v396
  %v398 = vld [vmem:[%s4] sm:$0x1]
  %v399 = vmul.f32 %v389, %v397
  %v400 = vsub.f32 %v398, %v399
  %v402 = vlaneseq
  %v403 = vshrl.u32 %v402, 7
  %v404 = vsub.s32 0, %v403
  %v405 = vrot.slane %v397, %v404
  %v407 = vmul.f32 %v197, %v405
  %v408 = vmul.f32 %v200, %v405
  %v409 = vmul.f32 %v205, %v405
  %v410 = vmul.f32 %v208, %v405
  %v412 = vlaneseq
  %v413 = vshrl.u32 %v412, 7
  %v414 = vsub.s32 0, %v413
  %v415 = vrot.slane %v400, %v414
  %v417 = vadd.f32 %v407, %v415
  %v418 = vadd.f32 %v408, %v415
  %v419 = vadd.f32 %v409, %v415
  %v420 = vadd.f32 %v410, %v415
  %v421 = vmul.f32 %v417, %v417
  %v422 = vmul.f32 %v418, %v418
  %v423 = vmul.f32 %v419, %v419
  %v424 = vmul.f32 %v420, %v420
  %v425 = vmul.f32 %v421, %v417
  %v426 = vmul.f32 %v422, %v418
  %v427 = vmul.f32 %v423, %v419
  %v428 = vmul.f32 %v424, %v420
  %v429 = vmul.f32 %v425, 0.044715
  %v430 = vmul.f32 %v426, 0.044715
  %v431 = vmul.f32 %v427, 0.044715
  %v432 = vmul.f32 %v428, 0.044715
  %v433 = vadd.f32 %v417, %v429
  %v434 = vadd.f32 %v418, %v430
  %v435 = vadd.f32 %v419, %v431
  %v436 = vadd.f32 %v420, %v432
  %v437 = vmul.f32 %v433, 0.7978846
  %v438 = vmul.f32 %v434, 0.7978846
  %v439 = vmul.f32 %v435, 0.7978846
  %v440 = vmul.f32 %v436, 0.7978846
  %v441 = vmul.f32 %v417, 0.5
  %v442 = vmul.f32 %v418, 0.5
  %v443 = vmul.f32 %v419, 0.5
  %v444 = vmul.f32 %v420, 0.5
  %v445 = vtanh.pop %v437
  %v446 = vtanh.pop %v438
  %v447 = vtanh.pop %v439
  %v448 = vtanh.pop %v440
  %v449 = vadd.f32 %v445, 1.0
  %v450 = vadd.f32 %v446, 1.0
  %v451 = vadd.f32 %v447, 1.0
  %v452 = vadd.f32 %v448, 1.0
  %v453 = vmul.f32 %v441, %v449
  %v454 = vmul.f32 %v442, %v450
  %v455 = vmul.f32 %v443, %v451
  %v456 = vmul.f32 %v444, %v452
  %457 = vst [vmem:[%s5] sm:$0xff] %v453
  %458 = vst [vmem:[%s5 + $0x8] sm:$0xff] %v454
  %459 = vst [vmem:[%s5 + $0x10] sm:$0xff] %v455
  %460 = vst [vmem:[%s5 + $0x18] sm:$0xff] %v456
  // Predicated region
  $region22: #{conv_transpose_bn_gelu.1} parent=0 // pred_check
    _
  $region23: #{conv_transpose_bn_gelu.1} parent=0 // pred_check_branch
    %462 = sbr.rel (0) target = $region25
  $region24: #{conv_transpose_bn_gelu.1} parent=0 // pred_region
    _
  $region25: #{conv_transpose_bn_gelu.1} parent=0 // pred_fallthru
    _
  // Predicated region
  $region26: #{conv_transpose_bn_gelu.1} parent=0 // pred_check
    _
  $region27: #{conv_transpose_bn_gelu.1} parent=0 // pred_check_branch
    %464 = sbr.rel (0) target = $region29
  $region28: #{conv_transpose_bn_gelu.1} parent=0 // pred_region
    _
  $region29: #{conv_transpose_bn_gelu.1} parent=0 // pred_fallthru
    _

</llo_original>
